<compile_context>
chip_gen: v5e
topology: v5e:2x2
jax: 0.10.0
libtpu: 0.0.40
codegen_flags: <defaults>
</compile_context>

<pallas_src>
import jax
import jax.numpy as jnp
from jax import lax
from jax.experimental import pallas as pl
from jax.experimental.pallas import tpu as pltpu


# (in_features, out_features) per layer of model_3round.
_DIMS = [(5, 32), (32, 64), (64, 32), (32, 16), (16, 6)]

# Contract lhs dim 1 with rhs dim 1 ("NT" matmul: lhs plain, rhs logically transposed).
_NT_DIMS = (((1,), (1,)), ((), ()))


def _mlp_kernel(x_ref,
                w1_ref, w2_ref, w3_ref, w4_ref, w5_ref,
                b1_ref, b2_ref, b3_ref, b4_ref, b5_ref,
                o_ref):
    """One batch tile. Activations are (features, TB): batch sits on the lane axis."""
    # Layer 1: (32, TB) = W1 (32, 5) @ x^T (5, TB), consumed directly from the (TB, 5)
    # input tile via NT dimension numbers (no materialized transpose).
    h = lax.dot_general(w1_ref[...], x_ref[...], _NT_DIMS,
                        preferred_element_type=jnp.float32)
    h = jnp.tanh(h + b1_ref[...])                                                 # 5  -> 32
    h = jnp.tanh(jnp.dot(w2_ref[...], h, preferred_element_type=jnp.float32)
                 + b2_ref[...])                                                   # 32 -> 64
    h = jnp.tanh(jnp.dot(w3_ref[...], h, preferred_element_type=jnp.float32)
                 + b3_ref[...])                                                   # 64 -> 32
    h = jnp.tanh(jnp.dot(w4_ref[...], h, preferred_element_type=jnp.float32)
                 + b4_ref[...])                                                   # 32 -> 16
    o_ref[...] = (jnp.dot(w5_ref[...], h, preferred_element_type=jnp.float32)
                  + b5_ref[...])                                                  # 16 -> 6


def _round_up(n, m):
    return ((n + m - 1) // m) * m


def _choose_tile(B, block_batch):
    """Pick the batch tile (lane axis of the transposed output)."""
    # Single tile: any B is legal because every block dim equals the full array dim.
    if B < 256 and B <= block_batch:
        return B
    # Multi-tile / megacore-split: the batch tile sits on the output lane axis, so it must
    # be a multiple of 128 (which also satisfies the input sublane multiple-of-8 rule).
    tb = min(_round_up(block_batch, 128), _round_up(B, 128))
    # Keep at least 2 grid steps so the "parallel" batch axis feeds both v7x TensorCores.
    tb = min(tb, _round_up(pl.cdiv(B, 2), 128))
    return max(tb, 128)


def _fold_sigmoid(params):
    """Exact affine refactoring: sigmoid(z) = 0.5*tanh(z/2) + 0.5 folded into weights.

    After folding, layers 1-4 are t_i = tanh(W_i' a_{i-1} + b_i') and the output layer is
    out = W5' t_4 + b5'.  Weights stay in PyTorch (out_features, in_features) layout and
    biases are returned as (out_features, 1) columns for the transposed kernel layout.
    """
    folded = []
    for i, (_, dout) in enumerate(_DIMS, start=1):
        w, b = params[f"fc{i}"]                    # w: (dout, din), b: (dout,)
        if i > 1:                                  # previous activation was 0.5*t + 0.5
            b = b + 0.5 * jnp.sum(w, axis=1)
            w = 0.5 * w
        if i < 5:                                  # this layer's activation is tanh(0.5*z)
            w = 0.5 * w
            b = 0.5 * b
        folded.append((w, b.reshape(dout, 1)))
    return folded


def model_3round_forward(x, params, *, block_batch=4096):
    """x: (B, 5) float32 -> (B, 6) float32.  params: dict fc1..fc5 -> (w (out,in), b (out,)).

    For production, wrap in jax.jit so the weight folding and the final transpose fuse.
    """
    B = x.shape[0]
    tb = _choose_tile(B, block_batch)
    grid = (pl.cdiv(B, tb),)

    folded = _fold_sigmoid(params)
    weights = [w for w, _ in folded]
    biases = [b for _, b in folded]

    # Weights/biases: full-array blocks with constant index maps -> DMA'd once, resident
    # in VMEM across all batch tiles.
    resident = lambda a: pl.BlockSpec(a.shape, lambda i: (0,) * a.ndim)
    in_specs = ([pl.BlockSpec((tb, 5), lambda i: (i, 0))]
                + [resident(w) for w in weights]
                + [resident(b) for b in biases])

    out_t = pl.pallas_call(
        _mlp_kernel,
        out_shape=jax.ShapeDtypeStruct((6, B), jnp.float32),
        grid=grid,
        in_specs=in_specs,
        # Lane-dense output: batch tile on the lane axis -> unmasked vector stores.
        out_specs=pl.BlockSpec((6, tb), lambda i: (0, i)),
        compiler_params=pltpu.CompilerParams(
            dimension_semantics=("parallel",),   # shard batch tiles across TCs on v7x
            vmem_limit_bytes=32 * 1024 * 1024,
        ),
    )(x, *weights, *biases)

    return out_t.T   # (B, 6); cheap XLA transpose outside the kernel


def init_params(key):
    """Deterministic init matching nn.Linear: w (out_features, in_features), b (out_features,)."""
    params = {}
    for i, (din, dout) in enumerate(_DIMS, start=1):
        key, kw, kb = jax.random.split(key, 3)
        bound = 1.0 / jnp.sqrt(din)  # PyTorch default Linear init range
        w = jax.random.uniform(kw, (dout, din), jnp.float32, -bound, bound)
        b = jax.random.uniform(kb, (dout,), jnp.float32, -bound, bound)
        params[f"fc{i}"] = (w, b)
    return params


def _reference_forward(x, params):
    h = x
    for i in range(1, 5):
        w, b = params[f"fc{i}"]
        h = jax.nn.sigmoid(h @ w.T + b)
    w, b = params["fc5"]
    return h @ w.T + b


if __name__ == "__main__":
    key = jax.random.PRNGKey(0)
    kx, kx2, kx3, kp = jax.random.split(key, 4)
    params = init_params(kp)

    # Multi-tile case: B=512 with a 128-row batch tile -> grid of 4 pipelined steps.
    B = 512
    x = jax.random.normal(kx, (B, 5), jnp.float32)
    out = jax.block_until_ready(model_3round_forward(x, params, block_batch=128))
    ref = _reference_forward(x, params)
    assert out.shape == (B, 6), out.shape
    assert jnp.allclose(out, ref, atol=3e-5, rtol=1e-3), float(jnp.max(jnp.abs(out - ref)))

    # Single-tile small-batch case with the default block size.
    B2 = 8
    x2 = jax.random.normal(kx2, (B2, 5), jnp.float32)
    out2 = jax.block_until_ready(model_3round_forward(x2, params))
    ref2 = _reference_forward(x2, params)
    assert out2.shape == (B2, 6), out2.shape
    assert jnp.allclose(out2, ref2, atol=3e-5, rtol=1e-3), float(jnp.max(jnp.abs(out2 - ref2)))

    # Ragged case: B=300 -> two 256-wide tiles, masked stores on the partial last tile.
    B3 = 300
    x3 = jax.random.normal(kx3, (B3, 5), jnp.float32)
    out3 = jax.block_until_ready(model_3round_forward(x3, params))
    ref3 = _reference_forward(x3, params)
    assert out3.shape == (B3, 6), out3.shape
    assert jnp.allclose(out3, ref3, atol=3e-5, rtol=1e-3), float(jnp.max(jnp.abs(out3 - ref3)))

    print("KERNEL_OK")
</pallas_src>

<mosaic_0001>
module attributes {stable_mosaic.version = 11 : i64} {
  func.func @_mlp_kernel(%arg0: i32, %arg1: memref<128x5xf32, #tpu.memory_space<vmem>>, %arg2: memref<32x5xf32, #tpu.memory_space<vmem>>, %arg3: memref<64x32xf32, #tpu.memory_space<vmem>>, %arg4: memref<32x64xf32, #tpu.memory_space<vmem>>, %arg5: memref<16x32xf32, #tpu.memory_space<vmem>>, %arg6: memref<6x16xf32, #tpu.memory_space<vmem>>, %arg7: memref<32x1xf32, #tpu.memory_space<vmem>>, %arg8: memref<64x1xf32, #tpu.memory_space<vmem>>, %arg9: memref<32x1xf32, #tpu.memory_space<vmem>>, %arg10: memref<16x1xf32, #tpu.memory_space<vmem>>, %arg11: memref<6x1xf32, #tpu.memory_space<vmem>>, %arg12: memref<6x128xf32, #tpu.memory_space<vmem>>) attributes {dimension_semantics = [#tpu.dimension_semantics<parallel>], iteration_bounds = array<i64: 4>, scalar_prefetch = 0 : i64, scratch_operands = 0 : i64, tpu.core_type = #tpu.core_type<tc>, window_params = [{transform_indices = @transform_0, window_bounds = array<i64: 128, 5>}, {pipeline_mode = #tpu.pipeline_mode<synchronous>, transform_indices = @transform_1, window_bounds = array<i64: 32, 5>}, {pipeline_mode = #tpu.pipeline_mode<synchronous>, transform_indices = @transform_2, window_bounds = array<i64: 64, 32>}, {pipeline_mode = #tpu.pipeline_mode<synchronous>, transform_indices = @transform_3, window_bounds = array<i64: 32, 64>}, {pipeline_mode = #tpu.pipeline_mode<synchronous>, transform_indices = @transform_4, window_bounds = array<i64: 16, 32>}, {pipeline_mode = #tpu.pipeline_mode<synchronous>, transform_indices = @transform_5, window_bounds = array<i64: 6, 16>}, {pipeline_mode = #tpu.pipeline_mode<synchronous>, transform_indices = @transform_6, window_bounds = array<i64: 32, 1>}, {pipeline_mode = #tpu.pipeline_mode<synchronous>, transform_indices = @transform_7, window_bounds = array<i64: 64, 1>}, {pipeline_mode = #tpu.pipeline_mode<synchronous>, transform_indices = @transform_8, window_bounds = array<i64: 32, 1>}, {pipeline_mode = #tpu.pipeline_mode<synchronous>, transform_indices = @transform_9, window_bounds = array<i64: 16, 1>}, {pipeline_mode = #tpu.pipeline_mode<synchronous>, transform_indices = @transform_10, window_bounds = array<i64: 6, 1>}, {transform_indices = @transform_11, window_bounds = array<i64: 6, 128>}]} {
    %c0 = arith.constant 0 : index
    %c0_0 = arith.constant 0 : index
    %0 = vector.load %arg2[%c0, %c0_0] : memref<32x5xf32, #tpu.memory_space<vmem>>, vector<32x5xf32>
    %c0_1 = arith.constant 0 : index
    %c0_2 = arith.constant 0 : index
    %1 = vector.load %arg1[%c0_1, %c0_2] : memref<128x5xf32, #tpu.memory_space<vmem>>, vector<128x5xf32>
    %cst = arith.constant dense<0.000000e+00> : vector<32x128xf32>
    %2 = tpu.matmul %0, %1, %cst {dimension_numbers = #tpu.dot_dimension_numbers<[1], [1], [0], [0], [0, 0, 1, 0], [], []>} : vector<32x5xf32>, vector<128x5xf32>, vector<32x128xf32> -> vector<32x128xf32>
    %c0_3 = arith.constant 0 : index
    %c0_4 = arith.constant 0 : index
    %3 = vector.load %arg7[%c0_3, %c0_4] : memref<32x1xf32, #tpu.memory_space<vmem>>, vector<32x1xf32>
    %4 = vector.broadcast %3 : vector<32x1xf32> to vector<32x128xf32>
    %5 = arith.addf %2, %4 : vector<32x128xf32>
    %6 = math.tanh %5 : vector<32x128xf32>
    %c0_5 = arith.constant 0 : index
    %c0_6 = arith.constant 0 : index
    %7 = vector.load %arg3[%c0_5, %c0_6] : memref<64x32xf32, #tpu.memory_space<vmem>>, vector<64x32xf32>
    %cst_7 = arith.constant dense<0.000000e+00> : vector<64x128xf32>
    %8 = tpu.matmul %7, %6, %cst_7 {dimension_numbers = #tpu.dot_dimension_numbers<[1], [0], [0], [1], [0, 0, 1, 1], [], []>} : vector<64x32xf32>, vector<32x128xf32>, vector<64x128xf32> -> vector<64x128xf32>
    %c0_8 = arith.constant 0 : index
    %c0_9 = arith.constant 0 : index
    %9 = vector.load %arg8[%c0_8, %c0_9] : memref<64x1xf32, #tpu.memory_space<vmem>>, vector<64x1xf32>
    %10 = vector.broadcast %9 : vector<64x1xf32> to vector<64x128xf32>
    %11 = arith.addf %8, %10 : vector<64x128xf32>
    %12 = math.tanh %11 : vector<64x128xf32>
    %c0_10 = arith.constant 0 : index
    %c0_11 = arith.constant 0 : index
    %13 = vector.load %arg4[%c0_10, %c0_11] : memref<32x64xf32, #tpu.memory_space<vmem>>, vector<32x64xf32>
    %cst_12 = arith.constant dense<0.000000e+00> : vector<32x128xf32>
    %14 = tpu.matmul %13, %12, %cst_12 {dimension_numbers = #tpu.dot_dimension_numbers<[1], [0], [0], [1], [0, 0, 1, 1], [], []>} : vector<32x64xf32>, vector<64x128xf32>, vector<32x128xf32> -> vector<32x128xf32>
    %c0_13 = arith.constant 0 : index
    %c0_14 = arith.constant 0 : index
    %15 = vector.load %arg9[%c0_13, %c0_14] : memref<32x1xf32, #tpu.memory_space<vmem>>, vector<32x1xf32>
    %16 = vector.broadcast %15 : vector<32x1xf32> to vector<32x128xf32>
    %17 = arith.addf %14, %16 : vector<32x128xf32>
    %18 = math.tanh %17 : vector<32x128xf32>
    %c0_15 = arith.constant 0 : index
    %c0_16 = arith.constant 0 : index
    %19 = vector.load %arg5[%c0_15, %c0_16] : memref<16x32xf32, #tpu.memory_space<vmem>>, vector<16x32xf32>
    %cst_17 = arith.constant dense<0.000000e+00> : vector<16x128xf32>
    %20 = tpu.matmul %19, %18, %cst_17 {dimension_numbers = #tpu.dot_dimension_numbers<[1], [0], [0], [1], [0, 0, 1, 1], [], []>} : vector<16x32xf32>, vector<32x128xf32>, vector<16x128xf32> -> vector<16x128xf32>
    %c0_18 = arith.constant 0 : index
    %c0_19 = arith.constant 0 : index
    %21 = vector.load %arg10[%c0_18, %c0_19] : memref<16x1xf32, #tpu.memory_space<vmem>>, vector<16x1xf32>
    %22 = vector.broadcast %21 : vector<16x1xf32> to vector<16x128xf32>
    %23 = arith.addf %20, %22 : vector<16x128xf32>
    %24 = math.tanh %23 : vector<16x128xf32>
    %c0_20 = arith.constant 0 : index
    %c0_21 = arith.constant 0 : index
    %25 = vector.load %arg6[%c0_20, %c0_21] : memref<6x16xf32, #tpu.memory_space<vmem>>, vector<6x16xf32>
    %cst_22 = arith.constant dense<0.000000e+00> : vector<6x128xf32>
    %26 = tpu.matmul %25, %24, %cst_22 {dimension_numbers = #tpu.dot_dimension_numbers<[1], [0], [0], [1], [0, 0, 1, 1], [], []>} : vector<6x16xf32>, vector<16x128xf32>, vector<6x128xf32> -> vector<6x128xf32>
    %c0_23 = arith.constant 0 : index
    %c0_24 = arith.constant 0 : index
    %27 = vector.load %arg11[%c0_23, %c0_24] : memref<6x1xf32, #tpu.memory_space<vmem>>, vector<6x1xf32>
    %28 = vector.broadcast %27 : vector<6x1xf32> to vector<6x128xf32>
    %29 = arith.addf %26, %28 : vector<6x128xf32>
    %c0_25 = arith.constant 0 : index
    %c0_26 = arith.constant 0 : index
    %30 = vector.load %arg12[%c0_25, %c0_26] : memref<6x128xf32, #tpu.memory_space<vmem>>, vector<6x128xf32>
    tpu.vector_store %arg12[%c0_25, %c0_26], %29 {strides = array<i32>} : memref<6x128xf32, #tpu.memory_space<vmem>>, vector<6x128xf32>,
    return
  }
  func.func @transform_0(%arg0: i32) -> (i32, i32) {
    %c0_i32 = arith.constant 0 : i32
    %c0_i32_0 = arith.constant 0 : i32
    return %arg0, %c0_i32 : i32, i32
  }
  func.func @transform_1(%arg0: i32) -> (i32, i32) {
    %c0_i32 = arith.constant 0 : i32
    %c0_i32_0 = arith.constant 0 : i32
    %c0_i32_1 = arith.constant 0 : i32
    return %c0_i32, %c0_i32_0 : i32, i32
  }
  func.func @transform_2(%arg0: i32) -> (i32, i32) {
    %c0_i32 = arith.constant 0 : i32
    %c0_i32_0 = arith.constant 0 : i32
    %c0_i32_1 = arith.constant 0 : i32
    return %c0_i32, %c0_i32_0 : i32, i32
  }
  func.func @transform_3(%arg0: i32) -> (i32, i32) {
    %c0_i32 = arith.constant 0 : i32
    %c0_i32_0 = arith.constant 0 : i32
    %c0_i32_1 = arith.constant 0 : i32
    return %c0_i32, %c0_i32_0 : i32, i32
  }
  func.func @transform_4(%arg0: i32) -> (i32, i32) {
    %c0_i32 = arith.constant 0 : i32
    %c0_i32_0 = arith.constant 0 : i32
    %c0_i32_1 = arith.constant 0 : i32
    return %c0_i32, %c0_i32_0 : i32, i32
  }
  func.func @transform_5(%arg0: i32) -> (i32, i32) {
    %c0_i32 = arith.constant 0 : i32
    %c0_i32_0 = arith.constant 0 : i32
    %c0_i32_1 = arith.constant 0 : i32
    return %c0_i32, %c0_i32_0 : i32, i32
  }
  func.func @transform_6(%arg0: i32) -> (i32, i32) {
    %c0_i32 = arith.constant 0 : i32
    %c0_i32_0 = arith.constant 0 : i32
    %c0_i32_1 = arith.constant 0 : i32
    return %c0_i32, %c0_i32_0 : i32, i32
  }
  func.func @transform_7(%arg0: i32) -> (i32, i32) {
    %c0_i32 = arith.constant 0 : i32
    %c0_i32_0 = arith.constant 0 : i32
    %c0_i32_1 = arith.constant 0 : i32
    return %c0_i32, %c0_i32_0 : i32, i32
  }
  func.func @transform_8(%arg0: i32) -> (i32, i32) {
    %c0_i32 = arith.constant 0 : i32
    %c0_i32_0 = arith.constant 0 : i32
    %c0_i32_1 = arith.constant 0 : i32
    return %c0_i32, %c0_i32_0 : i32, i32
  }
  func.func @transform_9(%arg0: i32) -> (i32, i32) {
    %c0_i32 = arith.constant 0 : i32
    %c0_i32_0 = arith.constant 0 : i32
    %c0_i32_1 = arith.constant 0 : i32
    return %c0_i32, %c0_i32_0 : i32, i32
  }
  func.func @transform_10(%arg0: i32) -> (i32, i32) {
    %c0_i32 = arith.constant 0 : i32
    %c0_i32_0 = arith.constant 0 : i32
    %c0_i32_1 = arith.constant 0 : i32
    return %c0_i32, %c0_i32_0 : i32, i32
  }
  func.func @transform_11(%arg0: i32) -> (i32, i32) {
    %c0_i32 = arith.constant 0 : i32
    %c0_i32_0 = arith.constant 0 : i32
    return %c0_i32, %arg0 : i32, i32
  }
}

</mosaic_0001>

<llo_original>
// kernel: tpu_custom_call.1
$region0: #{tpu_custom_call.1}
  #allocation0 [shape = 'u32[]', space=smem, size = 0x4, offset = 0x4, fixed_abs, tag = 'smem constant byte address 0x4 - core index']
  #allocation1 [shape = 'u32[72,128]{1,0:T(1,128)}', space=vmem, size = 0x9000, scoped, tag = 'internal scratch']
  %s0 = inlined_call_operand.vmem [shape: f32[512,5], index: 0, kind: input, shape index: {}]
  %s1 = inlined_call_operand.vmem [shape: f32[32,5], index: 1, kind: input, shape index: {}]
  %s2 = inlined_call_operand.vmem [shape: f32[64,32], index: 2, kind: input, shape index: {}]
  %s3 = inlined_call_operand.vmem [shape: f32[32,64], index: 3, kind: input, shape index: {}]
  %s4 = inlined_call_operand.vmem [shape: f32[16,32], index: 4, kind: input, shape index: {}]
  %s5 = inlined_call_operand.vmem [shape: f32[6,16], index: 5, kind: input, shape index: {}]
  %s6 = inlined_call_operand.vmem [shape: f32[32,1], index: 6, kind: input, shape index: {}]
  %s7 = inlined_call_operand.vmem [shape: f32[64,1], index: 7, kind: input, shape index: {}]
  %s8 = inlined_call_operand.vmem [shape: f32[32,1], index: 8, kind: input, shape index: {}]
  %s9 = inlined_call_operand.vmem [shape: f32[16,1], index: 9, kind: input, shape index: {}]
  %s10 = inlined_call_operand.vmem [shape: f32[6,1], index: 10, kind: input, shape index: {}]
  %s11 = inlined_call_operand.hbm [shape: f32[6,512], index: 11, kind: output, shape index: {}]
  %s12 = sld [smem:[#allocation0]]
  $region77: #{tpu_custom_call.1} parent=0
    _
  %s14 = ssub.s32 1, %s12
  %s15 = scalar_select 0, %s14, %s12
  $region1: #{tpu_custom_call.1} parent=0
    #allocation2 [shape = 'u8[8192]{0}', space=vmem, size = 0x2000, scoped, tag = 'output window, operand 0']
    #allocation3 [shape = 's32[2]{0}', space=sflag, size = 0x8, scoped, tag = 'scoped memory for tpu_custom_call.1']
    %16 = vsyncpa [#allocation3], 0
    %s17 = scalar_lea.sflag [#allocation3], 1
    %18 = vsyncpa %s17, 0
    loop: start=0, step=1, limit=6
    $region2: #{tpu_custom_call.1} parent=1 // loop_pre_header
      _
    $region3: #{tpu_custom_call.1} parent=1 // loop_header
      %s20 = sphi 0, %s24
      %p21 = scmp.ge.s32.totalorder %s20, 6
      %s30 = sphi 0, %s32
      %s33 = sphi 0, %s30
      %s34 = sphi 0, %s33
      %s50 = sphi 0, %s34
      %s54 = sphi 0, %s54
      %s56 = sphi 0, %s54
      %s57 = sphi 0, %s56
      %s71 = sphi 0, %s57
      %s75 = sphi 0, %s75
      %s77 = sphi 0, %s75
      %s78 = sphi 0, %s77
      %s92 = sphi 0, %s78
      %s96 = sphi 0, %s96
      %s98 = sphi 0, %s96
      %s99 = sphi 0, %s98
      %s113 = sphi 0, %s99
      %s117 = sphi 0, %s117
      %s119 = sphi 0, %s117
      %s120 = sphi 0, %s119
      %s134 = sphi 0, %s120
      %s138 = sphi 0, %s138
      %s140 = sphi 0, %s138
      %s141 = sphi 0, %s140
      %s155 = sphi 0, %s141
      %s159 = sphi 0, %s159
      %s161 = sphi 0, %s159
      %s162 = sphi 0, %s161
      %s176 = sphi 0, %s162
      %s180 = sphi 0, %s180
      %s182 = sphi 0, %s180
      %s183 = sphi 0, %s182
      %s197 = sphi 0, %s183
      %s201 = sphi 0, %s201
      %s203 = sphi 0, %s201
      %s204 = sphi 0, %s203
      %s218 = sphi 0, %s204
      %s222 = sphi 0, %s222
      %s224 = sphi 0, %s222
      %s225 = sphi 0, %s224
      %s239 = sphi 0, %s225
      %s243 = sphi 0, %s243
      %s245 = sphi 0, %s243
      %s246 = sphi 0, %s245
      %s260 = sphi 0, %s246
      %s266 = sphi 0, %s268
      %s269 = sphi 0, %s266
      %s270 = sphi 0, %s269
      %s286 = sphi 0, %s270
    $region4: #{tpu_custom_call.1} parent=1 // loop_header_branch
      %23 = sbr.rel (%p21) target = $region8
    $region5: #{tpu_custom_call.1} parent=1 // loop_body
      %s25 = ssub.s32 %s20, 1
      %s26 = ssub.s32 %s20, 2
      %s27 = sadd.s32 %s20, 1
      %s28 = ssub.s32 %s20, %s27
      %p29 = scmp.eq.s32.totalorder %s28, 0
      %s31 = sadd.s32 %s30, 1
      %s32 = scalar_select %p29, %s30, %s31
      %p35 = pneg %p29
      %p36 = scmp.eq.s32.totalorder %s20, 3
      %p37 = por %p35, %p36
      %p38 = scmp.ne.s32.totalorder %s30, %s33
      %p39 = scmp.eq.s32.totalorder %s20, 0
      %p40 = por %p38, %p39
      %p41 = scmp.ne.s32.totalorder %s30, %s33
      %p42 = scmp.eq.s32.totalorder %s25, 3
      %p43 = por %p41, %p42
      %p44 = scmp.ne.s32.totalorder %s33, %s34
      %p45 = scmp.eq.s32.totalorder %s25, 0
      %p46 = por %p44, %p45
      %p47 = scmp.ne.s32.totalorder %s33, %s34
      %p48 = scmp.eq.s32.totalorder %s26, 3
      %p49 = por %p47, %p48
      %p51 = scmp.ne.s32.totalorder %s34, %s50
      %p52 = scmp.eq.s32.totalorder %s26, 0
      %p53 = por %p51, %p52
      %s55 = sadd.s32 %s54, 1
      %p58 = scmp.eq.s32.totalorder %s20, 3
      %p59 = scmp.ne.s32.totalorder %s54, %s56
      %p60 = scmp.eq.s32.totalorder %s20, 0
      %p61 = por %p59, %p60
      %p62 = scmp.ne.s32.totalorder %s54, %s56
      %p63 = scmp.eq.s32.totalorder %s25, 3
      %p64 = por %p62, %p63
      %p65 = scmp.ne.s32.totalorder %s56, %s57
      %p66 = scmp.eq.s32.totalorder %s25, 0
      %p67 = por %p65, %p66
      %p68 = scmp.ne.s32.totalorder %s56, %s57
      %p69 = scmp.eq.s32.totalorder %s26, 3
      %p70 = por %p68, %p69
      %p72 = scmp.ne.s32.totalorder %s57, %s71
      %p73 = scmp.eq.s32.totalorder %s26, 0
      %p74 = por %p72, %p73
      %s76 = sadd.s32 %s75, 1
      %p79 = scmp.eq.s32.totalorder %s20, 3
      %p80 = scmp.ne.s32.totalorder %s75, %s77
      %p81 = scmp.eq.s32.totalorder %s20, 0
      %p82 = por %p80, %p81
      %p83 = scmp.ne.s32.totalorder %s75, %s77
      %p84 = scmp.eq.s32.totalorder %s25, 3
      %p85 = por %p83, %p84
      %p86 = scmp.ne.s32.totalorder %s77, %s78
      %p87 = scmp.eq.s32.totalorder %s25, 0
      %p88 = por %p86, %p87
      %p89 = scmp.ne.s32.totalorder %s77, %s78
      %p90 = scmp.eq.s32.totalorder %s26, 3
      %p91 = por %p89, %p90
      %p93 = scmp.ne.s32.totalorder %s78, %s92
      %p94 = scmp.eq.s32.totalorder %s26, 0
      %p95 = por %p93, %p94
      %s97 = sadd.s32 %s96, 1
      %p100 = scmp.eq.s32.totalorder %s20, 3
      %p101 = scmp.ne.s32.totalorder %s96, %s98
      %p102 = scmp.eq.s32.totalorder %s20, 0
      %p103 = por %p101, %p102
      %p104 = scmp.ne.s32.totalorder %s96, %s98
      %p105 = scmp.eq.s32.totalorder %s25, 3
      %p106 = por %p104, %p105
      %p107 = scmp.ne.s32.totalorder %s98, %s99
      %p108 = scmp.eq.s32.totalorder %s25, 0
      %p109 = por %p107, %p108
      %p110 = scmp.ne.s32.totalorder %s98, %s99
      %p111 = scmp.eq.s32.totalorder %s26, 3
      %p112 = por %p110, %p111
      %p114 = scmp.ne.s32.totalorder %s99, %s113
      %p115 = scmp.eq.s32.totalorder %s26, 0
      %p116 = por %p114, %p115
      %s118 = sadd.s32 %s117, 1
      %p121 = scmp.eq.s32.totalorder %s20, 3
      %p122 = scmp.ne.s32.totalorder %s117, %s119
      %p123 = scmp.eq.s32.totalorder %s20, 0
      %p124 = por %p122, %p123
      %p125 = scmp.ne.s32.totalorder %s117, %s119
      %p126 = scmp.eq.s32.totalorder %s25, 3
      %p127 = por %p125, %p126
      %p128 = scmp.ne.s32.totalorder %s119, %s120
      %p129 = scmp.eq.s32.totalorder %s25, 0
      %p130 = por %p128, %p129
      %p131 = scmp.ne.s32.totalorder %s119, %s120
      %p132 = scmp.eq.s32.totalorder %s26, 3
      %p133 = por %p131, %p132
      %p135 = scmp.ne.s32.totalorder %s120, %s134
      %p136 = scmp.eq.s32.totalorder %s26, 0
      %p137 = por %p135, %p136
      %s139 = sadd.s32 %s138, 1
      %p142 = scmp.eq.s32.totalorder %s20, 3
      %p143 = scmp.ne.s32.totalorder %s138, %s140
      %p144 = scmp.eq.s32.totalorder %s20, 0
      %p145 = por %p143, %p144
      %p146 = scmp.ne.s32.totalorder %s138, %s140
      %p147 = scmp.eq.s32.totalorder %s25, 3
      %p148 = por %p146, %p147
      %p149 = scmp.ne.s32.totalorder %s140, %s141
      %p150 = scmp.eq.s32.totalorder %s25, 0
      %p151 = por %p149, %p150
      %p152 = scmp.ne.s32.totalorder %s140, %s141
      %p153 = scmp.eq.s32.totalorder %s26, 3
      %p154 = por %p152, %p153
      %p156 = scmp.ne.s32.totalorder %s141, %s155
      %p157 = scmp.eq.s32.totalorder %s26, 0
      %p158 = por %p156, %p157
      %s160 = sadd.s32 %s159, 1
      %p163 = scmp.eq.s32.totalorder %s20, 3
      %p164 = scmp.ne.s32.totalorder %s159, %s161
      %p165 = scmp.eq.s32.totalorder %s20, 0
      %p166 = por %p164, %p165
      %p167 = scmp.ne.s32.totalorder %s159, %s161
      %p168 = scmp.eq.s32.totalorder %s25, 3
      %p169 = por %p167, %p168
      %p170 = scmp.ne.s32.totalorder %s161, %s162
      %p171 = scmp.eq.s32.totalorder %s25, 0
      %p172 = por %p170, %p171
      %p173 = scmp.ne.s32.totalorder %s161, %s162
      %p174 = scmp.eq.s32.totalorder %s26, 3
      %p175 = por %p173, %p174
      %p177 = scmp.ne.s32.totalorder %s162, %s176
      %p178 = scmp.eq.s32.totalorder %s26, 0
      %p179 = por %p177, %p178
      %s181 = sadd.s32 %s180, 1
      %p184 = scmp.eq.s32.totalorder %s20, 3
      %p185 = scmp.ne.s32.totalorder %s180, %s182
      %p186 = scmp.eq.s32.totalorder %s20, 0
      %p187 = por %p185, %p186
      %p188 = scmp.ne.s32.totalorder %s180, %s182
      %p189 = scmp.eq.s32.totalorder %s25, 3
      %p190 = por %p188, %p189
      %p191 = scmp.ne.s32.totalorder %s182, %s183
      %p192 = scmp.eq.s32.totalorder %s25, 0
      %p193 = por %p191, %p192
      %p194 = scmp.ne.s32.totalorder %s182, %s183
      %p195 = scmp.eq.s32.totalorder %s26, 3
      %p196 = por %p194, %p195
      %p198 = scmp.ne.s32.totalorder %s183, %s197
      %p199 = scmp.eq.s32.totalorder %s26, 0
      %p200 = por %p198, %p199
      %s202 = sadd.s32 %s201, 1
      %p205 = scmp.eq.s32.totalorder %s20, 3
      %p206 = scmp.ne.s32.totalorder %s201, %s203
      %p207 = scmp.eq.s32.totalorder %s20, 0
      %p208 = por %p206, %p207
      %p209 = scmp.ne.s32.totalorder %s201, %s203
      %p210 = scmp.eq.s32.totalorder %s25, 3
      %p211 = por %p209, %p210
      %p212 = scmp.ne.s32.totalorder %s203, %s204
      %p213 = scmp.eq.s32.totalorder %s25, 0
      %p214 = por %p212, %p213
      %p215 = scmp.ne.s32.totalorder %s203, %s204
      %p216 = scmp.eq.s32.totalorder %s26, 3
      %p217 = por %p215, %p216
      %p219 = scmp.ne.s32.totalorder %s204, %s218
      %p220 = scmp.eq.s32.totalorder %s26, 0
      %p221 = por %p219, %p220
      %s223 = sadd.s32 %s222, 1
      %p226 = scmp.eq.s32.totalorder %s20, 3
      %p227 = scmp.ne.s32.totalorder %s222, %s224
      %p228 = scmp.eq.s32.totalorder %s20, 0
      %p229 = por %p227, %p228
      %p230 = scmp.ne.s32.totalorder %s222, %s224
      %p231 = scmp.eq.s32.totalorder %s25, 3
      %p232 = por %p230, %p231
      %p233 = scmp.ne.s32.totalorder %s224, %s225
      %p234 = scmp.eq.s32.totalorder %s25, 0
      %p235 = por %p233, %p234
      %p236 = scmp.ne.s32.totalorder %s224, %s225
      %p237 = scmp.eq.s32.totalorder %s26, 3
      %p238 = por %p236, %p237
      %p240 = scmp.ne.s32.totalorder %s225, %s239
      %p241 = scmp.eq.s32.totalorder %s26, 0
      %p242 = por %p240, %p241
      %s244 = sadd.s32 %s243, 1
      %p247 = scmp.eq.s32.totalorder %s20, 3
      %p248 = scmp.ne.s32.totalorder %s243, %s245
      %p249 = scmp.eq.s32.totalorder %s20, 0
      %p250 = por %p248, %p249
      %p251 = scmp.ne.s32.totalorder %s243, %s245
      %p252 = scmp.eq.s32.totalorder %s25, 3
      %p253 = por %p251, %p252
      %p254 = scmp.ne.s32.totalorder %s245, %s246
      %p255 = scmp.eq.s32.totalorder %s25, 0
      %p256 = por %p254, %p255
      %p257 = scmp.ne.s32.totalorder %s245, %s246
      %p258 = scmp.eq.s32.totalorder %s26, 3
      %p259 = por %p257, %p258
      %p261 = scmp.ne.s32.totalorder %s246, %s260
      %p262 = scmp.eq.s32.totalorder %s26, 0
      %p263 = por %p261, %p262
      %s264 = ssub.s32 %s20, %s27
      %p265 = scmp.eq.s32.totalorder %s264, 0
      %s267 = sadd.s32 %s266, 1
      %s268 = scalar_select %p265, %s266, %s267
      %p271 = pneg %p265
      %p272 = scmp.eq.s32.totalorder %s20, 3
      %p273 = por %p271, %p272
      %p274 = scmp.ne.s32.totalorder %s266, %s269
      %p275 = scmp.eq.s32.totalorder %s20, 0
      %p276 = por %p274, %p275
      %p277 = scmp.ne.s32.totalorder %s266, %s269
      %p278 = scmp.eq.s32.totalorder %s25, 3
      %p279 = por %p277, %p278
      %p280 = scmp.ne.s32.totalorder %s269, %s270
      %p281 = scmp.eq.s32.totalorder %s25, 0
      %p282 = por %p280, %p281
      %p283 = scmp.ne.s32.totalorder %s269, %s270
      %p284 = scmp.eq.s32.totalorder %s26, 3
      %p285 = por %p283, %p284
      %p287 = scmp.ne.s32.totalorder %s270, %s286
      %p288 = scmp.eq.s32.totalorder %s26, 0
      %p289 = por %p287, %p288
      %p290 = scmp.le.s32.totalorder 1, %s20
      %p291 = scmp.lt.s32.totalorder %s20, 5
      %p292 = pnand %p290, %p291
      %p293 = pneg %p292
      // Predicated region
      $region9: #{tpu_custom_call.1} parent=5 // pred_check
        _
      $region10: #{tpu_custom_call.1} parent=5 // pred_check_branch
        %295 = sbr.rel (%p292) target = $region12
      $region11: #{tpu_custom_call.1} parent=5 // pred_region
        %s296 = ssub.s32 %s20, 1
        // Predicated region
        $region13: #{tpu_custom_call.1} parent=11 // pred_check
          %p297 = pneg %p67
        $region14: #{tpu_custom_call.1} parent=11 // pred_check_branch
          %299 = sbr.rel (%p297) target = $region16
        $region15: #{tpu_custom_call.1} parent=11 // pred_region
          _
        $region16: #{tpu_custom_call.1} parent=11 // pred_fallthru
          _
        // Predicated region
        $region17: #{tpu_custom_call.1} parent=11 // pred_check
          %p300 = pneg %p88
        $region18: #{tpu_custom_call.1} parent=11 // pred_check_branch
          %302 = sbr.rel (%p300) target = $region20
        $region19: #{tpu_custom_call.1} parent=11 // pred_region
          _
        $region20: #{tpu_custom_call.1} parent=11 // pred_fallthru
          _
        // Predicated region
        $region21: #{tpu_custom_call.1} parent=11 // pred_check
          %p303 = pneg %p109
        $region22: #{tpu_custom_call.1} parent=11 // pred_check_branch
          %305 = sbr.rel (%p303) target = $region24
        $region23: #{tpu_custom_call.1} parent=11 // pred_region
          _
        $region24: #{tpu_custom_call.1} parent=11 // pred_fallthru
          _
        // Predicated region
        $region25: #{tpu_custom_call.1} parent=11 // pred_check
          %p306 = pneg %p130
        $region26: #{tpu_custom_call.1} parent=11 // pred_check_branch
          %308 = sbr.rel (%p306) target = $region28
        $region27: #{tpu_custom_call.1} parent=11 // pred_region
          _
        $region28: #{tpu_custom_call.1} parent=11 // pred_fallthru
          _
        // Predicated region
        $region29: #{tpu_custom_call.1} parent=11 // pred_check
          %p309 = pneg %p151
        $region30: #{tpu_custom_call.1} parent=11 // pred_check_branch
          %311 = sbr.rel (%p309) target = $region32
        $region31: #{tpu_custom_call.1} parent=11 // pred_region
          _
        $region32: #{tpu_custom_call.1} parent=11 // pred_fallthru
          _
        // Predicated region
        $region33: #{tpu_custom_call.1} parent=11 // pred_check
          %p312 = pneg %p172
        $region34: #{tpu_custom_call.1} parent=11 // pred_check_branch
          %314 = sbr.rel (%p312) target = $region36
        $region35: #{tpu_custom_call.1} parent=11 // pred_region
          _
        $region36: #{tpu_custom_call.1} parent=11 // pred_fallthru
          _
        // Predicated region
        $region37: #{tpu_custom_call.1} parent=11 // pred_check
          %p315 = pneg %p193
        $region38: #{tpu_custom_call.1} parent=11 // pred_check_branch
          %317 = sbr.rel (%p315) target = $region40
        $region39: #{tpu_custom_call.1} parent=11 // pred_region
          _
        $region40: #{tpu_custom_call.1} parent=11 // pred_fallthru
          _
        // Predicated region
        $region41: #{tpu_custom_call.1} parent=11 // pred_check
          %p318 = pneg %p214
        $region42: #{tpu_custom_call.1} parent=11 // pred_check_branch
          %320 = sbr.rel (%p318) target = $region44
        $region43: #{tpu_custom_call.1} parent=11 // pred_region
          _
        $region44: #{tpu_custom_call.1} parent=11 // pred_fallthru
          _
        // Predicated region
        $region45: #{tpu_custom_call.1} parent=11 // pred_check
          %p321 = pneg %p235
        $region46: #{tpu_custom_call.1} parent=11 // pred_check_branch
          %323 = sbr.rel (%p321) target = $region48
        $region47: #{tpu_custom_call.1} parent=11 // pred_region
          _
        $region48: #{tpu_custom_call.1} parent=11 // pred_fallthru
          _
        // Predicated region
        $region49: #{tpu_custom_call.1} parent=11 // pred_check
          %p324 = pneg %p256
        $region50: #{tpu_custom_call.1} parent=11 // pred_check_branch
          %326 = sbr.rel (%p324) target = $region52
        $region51: #{tpu_custom_call.1} parent=11 // pred_region
          _
        $region52: #{tpu_custom_call.1} parent=11 // pred_fallthru
          _
      $region12: #{tpu_custom_call.1} parent=5 // pred_fallthru
        _
      %p327 = scmp.lt.s32.totalorder %s20, 4
      // Predicated region
      $region53: #{tpu_custom_call.1} parent=5 // pred_check
        %p328 = pneg %p327
      $region54: #{tpu_custom_call.1} parent=5 // pred_check_branch
        %330 = sbr.rel (%p328) target = $region56
      $region55: #{tpu_custom_call.1} parent=5 // pred_region
        // Predicated region
        $region57: #{tpu_custom_call.1} parent=55 // pred_check
          %p331 = pneg %p40
        $region58: #{tpu_custom_call.1} parent=55 // pred_check_branch
          %333 = sbr.rel (%p331) target = $region60
        $region59: #{tpu_custom_call.1} parent=55 // pred_region
          %s334 = smul.u32 16, %s20
          %p335 = scmp.lt.s32.totalorder %s334, 63
          %s336 = scalar_select %p335, %s334, 63
          %s337 = smul.addr %s336, 8
          %s338 = scalar_lea.vmem %s0, %s337
          %s339 = smul.u32 16, %s20
        $region60: #{tpu_custom_call.1} parent=55 // pred_fallthru
          _
      $region56: #{tpu_custom_call.1} parent=5 // pred_fallthru
        _
      %p340 = scmp.le.s32.totalorder 1, %s20
      %p341 = scmp.lt.s32.totalorder %s20, 5
      %p342 = pnand %p340, %p341
      %p343 = pneg %p342
      // Predicated region
      $region61: #{tpu_custom_call.1} parent=5 // pred_check
        _
      $region62: #{tpu_custom_call.1} parent=5 // pred_check_branch
        %345 = sbr.rel (%p342) target = $region64
      $region63: #{tpu_custom_call.1} parent=5 // pred_region
        %s346 = ssub.s32 %s20, 1
        %s347 = smul.u32 16, %s25
        %p348 = scmp.lt.s32.totalorder %s347, 63
        %s349 = scalar_select %p348, %s347, 63
        %s350 = smul.addr %s349, 8
        %s351 = scalar_lea.vmem %s0, %s350
        %p352 = pneg %p46
        %p353 = pneg %p43
        %p354 = pneg %p67
        %p355 = pneg %p64
        %p356 = pneg %p88
        %p357 = pneg %p85
        %p358 = pneg %p109
        %p359 = pneg %p106
        %p360 = pneg %p130
        %p361 = pneg %p127
        %p362 = pneg %p151
        %p363 = pneg %p148
        %p364 = pneg %p172
        %p365 = pneg %p169
        %p366 = pneg %p193
        %p367 = pneg %p190
        %p368 = pneg %p214
        %p369 = pneg %p211
        %p370 = pneg %p235
        %p371 = pneg %p232
        %p372 = pneg %p256
        %p373 = pneg %p253
        %p374 = pneg %p282
        %p375 = pneg %p279
        %s376 = sand.u32 %s269, 1
        %s377 = scalar_lea.sflag [#allocation3], %s376
        %s378 = sand.u32 %s269, 1
        %s379 = smul.addr %s378, 8
        %s380 = scalar_lea.vmem [#allocation2], %s379
        %s381 = smul.u32 16, %s25
        %p382 = scmp.lt.s32.totalorder %s381, 63
        %s383 = scalar_select %p382, %s381, 63
        %s384 = smul.addr %s383, 8
        %s385 = scalar_lea.vmem %s0, %s384
        %s386 = smul.u32 16, %s25
        %v387 = vld [vmem:[%s1] sm:$0xff]
        %v388 = vld [vmem:[%s1 + $0x8] sm:$0xff]
        %v389 = vld [vmem:[%s1 + $0x10] sm:$0xff]
        %v390 = vld [vmem:[%s1 + $0x18] sm:$0xff]
        %v391 = vld [vmem:[%s385] sm:$0xff]
        %v392 = vld [vmem:[%s385 + $0x8] sm:$0xff]
        %v393 = vld [vmem:[%s385 + $0x10] sm:$0xff]
        %v394 = vld [vmem:[%s385 + $0x18] sm:$0xff]
        %v395 = vld [vmem:[%s385 + $0x20] sm:$0xff]
        %v396 = vld [vmem:[%s385 + $0x28] sm:$0xff]
        %v397 = vld [vmem:[%s385 + $0x30] sm:$0xff]
        %v398 = vld [vmem:[%s385 + $0x38] sm:$0xff]
        %v399 = vld [vmem:[%s385 + $0x40] sm:$0xff]
        %v400 = vld [vmem:[%s385 + $0x48] sm:$0xff]
        %v401 = vld [vmem:[%s385 + $0x50] sm:$0xff]
        %v402 = vld [vmem:[%s385 + $0x58] sm:$0xff]
        %v403 = vld [vmem:[%s385 + $0x60] sm:$0xff]
        %v404 = vld [vmem:[%s385 + $0x68] sm:$0xff]
        %v405 = vld [vmem:[%s385 + $0x70] sm:$0xff]
        %v406 = vld [vmem:[%s385 + $0x78] sm:$0xff]
        %v407 = vld [vmem:[%s6] sm:$0xff]
        %v408 = vld [vmem:[%s6 + $0x8] sm:$0xff]
        %v409 = vld [vmem:[%s6 + $0x10] sm:$0xff]
        %v410 = vld [vmem:[%s6 + $0x18] sm:$0xff]
        %412 = vset.pattern.permute.xlu0 0
        %413 = vperm.xlu0 %412, %v407
        %v414 = vpop.permute.xlu0 %413
        %417 = vset.pattern.permute.xlu0 0
        %418 = vperm.xlu0 %417, %v408
        %v419 = vpop.permute.xlu0 %418
        %422 = vset.pattern.permute.xlu0 0
        %423 = vperm.xlu0 %422, %v409
        %v424 = vpop.permute.xlu0 %423
        %427 = vset.pattern.permute.xlu0 0
        %428 = vperm.xlu0 %427, %v410
        %v429 = vpop.permute.xlu0 %428
        %vm431 = vcmask 39936
        %v433 = vsel %vm431, %v387, 0
        %v436 = vsel %vm431, %v388, 0
        %v439 = vsel %vm431, %v389, 0
        %v442 = vsel %vm431, %v390, 0
        %v445 = vsel %vm431, %v391, 0
        %v448 = vsel %vm431, %v392, 0
        %v451 = vsel %vm431, %v393, 0
        %v454 = vsel %vm431, %v394, 0
        %v457 = vsel %vm431, %v395, 0
        %v460 = vsel %vm431, %v396, 0
        %v463 = vsel %vm431, %v397, 0
        %v466 = vsel %vm431, %v398, 0
        %v469 = vsel %vm431, %v399, 0
        %v472 = vsel %vm431, %v400, 0
        %v475 = vsel %vm431, %v401, 0
        %v478 = vsel %vm431, %v402, 0
        %v481 = vsel %vm431, %v403, 0
        %v484 = vsel %vm431, %v404, 0
        %v487 = vsel %vm431, %v405, 0
        %v490 = vsel %vm431, %v406, 0
        %492 = vmatpush.xpose.msra.mxu0 %v490
        %493 = vmatpush.xpose.msra.mxu0 %v487
        %494 = vmatpush.xpose.msra.mxu0 %v484
        %495 = vmatpush.xpose.msra.mxu0 %v481
        %496 = vmatpush.xpose.msra.mxu0 %v478
        %497 = vmatpush.xpose.msra.mxu0 %v475
        %498 = vmatpush.xpose.msra.mxu0 %v472
        %499 = vmatpush.xpose.msra.mxu0 %v469
        %500 = vmatpush.xpose.msra.mxu0 %v466
        %501 = vmatpush.xpose.msra.mxu0 %v463
        %502 = vmatpush.xpose.msra.mxu0 %v460
        %503 = vmatpush.xpose.msra.mxu0 %v457
        %504 = vmatpush.xpose.msra.mxu0 %v454
        %505 = vmatpush.xpose.msra.mxu0 %v451
        %506 = vmatpush.xpose.msra.mxu0 %v448
        %507 = vmatpush.xpose.msra.mxu0 %v445
        %508 = vmatmul.f32.gmra.mxu0 %v433
        %v509 = vpop.f32.mrf.mxu0
        %v510 = vadd.f32 %v414, %v509
        %511 = vmatmul.f32.gmra.mxu0 %v436
        %v512 = vpop.f32.mrf.mxu0
        %v513 = vadd.f32 %v419, %v512
        %514 = vmatmul.f32.gmra.mxu0 %v439
        %v515 = vpop.f32.mrf.mxu0
        %v516 = vadd.f32 %v424, %v515
        %517 = vmatmul.f32.gmra.mxu0 %v442
        %v518 = vpop.f32.mrf.mxu0
        %v519 = vadd.f32 %v429, %v518
        %520 = vdwg.mxu0
        %v521 = vtanh.pop %v510
        %v522 = vtanh.pop %v513
        %v523 = vtanh.pop %v516
        %v524 = vtanh.pop %v519
        %v525 = vld [vmem:[%s2] sm:$0xff]
        %v526 = vld [vmem:[%s2 + $0x8] sm:$0xff]
        %v527 = vld [vmem:[%s2 + $0x10] sm:$0xff]
        %v528 = vld [vmem:[%s2 + $0x18] sm:$0xff]
        %v529 = vld [vmem:[%s2 + $0x20] sm:$0xff]
        %v530 = vld [vmem:[%s2 + $0x28] sm:$0xff]
        %v531 = vld [vmem:[%s2 + $0x30] sm:$0xff]
        %v532 = vld [vmem:[%s2 + $0x38] sm:$0xff]
        %v533 = vld [vmem:[%s7] sm:$0xff]
        %v534 = vld [vmem:[%s7 + $0x8] sm:$0xff]
        %v535 = vld [vmem:[%s7 + $0x10] sm:$0xff]
        %v536 = vld [vmem:[%s7 + $0x18] sm:$0xff]
        %v537 = vld [vmem:[%s7 + $0x20] sm:$0xff]
        %v538 = vld [vmem:[%s7 + $0x28] sm:$0xff]
        %v539 = vld [vmem:[%s7 + $0x30] sm:$0xff]
        %v540 = vld [vmem:[%s7 + $0x38] sm:$0xff]
        %542 = vset.pattern.permute.xlu0 0
        %543 = vperm.xlu0 %542, %v533
        %v544 = vpop.permute.xlu0 %543
        %547 = vset.pattern.permute.xlu0 0
        %548 = vperm.xlu0 %547, %v534
        %v549 = vpop.permute.xlu0 %548
        %552 = vset.pattern.permute.xlu0 0
        %553 = vperm.xlu0 %552, %v535
        %v554 = vpop.permute.xlu0 %553
        %557 = vset.pattern.permute.xlu0 0
        %558 = vperm.xlu0 %557, %v536
        %v559 = vpop.permute.xlu0 %558
        %562 = vset.pattern.permute.xlu0 0
        %563 = vperm.xlu0 %562, %v537
        %v564 = vpop.permute.xlu0 %563
        %567 = vset.pattern.permute.xlu0 0
        %568 = vperm.xlu0 %567, %v538
        %v569 = vpop.permute.xlu0 %568
        %572 = vset.pattern.permute.xlu0 0
        %573 = vperm.xlu0 %572, %v539
        %v574 = vpop.permute.xlu0 %573
        %577 = vset.pattern.permute.xlu0 0
        %578 = vperm.xlu0 %577, %v540
        %v579 = vpop.permute.xlu0 %578
        %vm581 = vcmask 261120
        %v583 = vsel %vm581, %v525, 0
        %v586 = vsel %vm581, %v526, 0
        %v589 = vsel %vm581, %v527, 0
        %v592 = vsel %vm581, %v528, 0
        %v595 = vsel %vm581, %v529, 0
        %v598 = vsel %vm581, %v530, 0
        %v601 = vsel %vm581, %v531, 0
        %v604 = vsel %vm581, %v532, 0
        %606 = vmatpush.msra.mxu0 0.0
        %607 = vmatpush.msra.mxu0 0.0
        %608 = vmatpush.msra.mxu0 0.0
        %609 = vmatpush.msra.mxu0 0.0
        %610 = vmatpush.msra.mxu0 0.0
        %611 = vmatpush.msra.mxu0 0.0
        %612 = vmatpush.msra.mxu0 0.0
        %613 = vmatpush.msra.mxu0 0.0
        %614 = vmatpush.msra.mxu0 0.0
        %615 = vmatpush.msra.mxu0 0.0
        %616 = vmatpush.msra.mxu0 0.0
        %617 = vmatpush.msra.mxu0 0.0
        %618 = vmatpush.msra.mxu0 %v524
        %619 = vmatpush.msra.mxu0 %v523
        %620 = vmatpush.msra.mxu0 %v522
        %621 = vmatpush.msra.mxu0 %v521
        %622 = vmatmul.f32.gmra.mxu0 %v583
        %v623 = vpop.f32.mrf.mxu0
        %v624 = vadd.f32 %v544, %v623
        %625 = vmatmul.f32.gmra.mxu0 %v586
        %v626 = vpop.f32.mrf.mxu0
        %v627 = vadd.f32 %v549, %v626
        %628 = vmatmul.f32.gmra.mxu0 %v589
        %v629 = vpop.f32.mrf.mxu0
        %v630 = vadd.f32 %v554, %v629
        %631 = vmatmul.f32.gmra.mxu0 %v592
        %v632 = vpop.f32.mrf.mxu0
        %v633 = vadd.f32 %v559, %v632
        %634 = vmatmul.f32.gmra.mxu0 %v595
        %v635 = vpop.f32.mrf.mxu0
        %v636 = vadd.f32 %v564, %v635
        %637 = vmatmul.f32.gmra.mxu0 %v598
        %v638 = vpop.f32.mrf.mxu0
        %v639 = vadd.f32 %v569, %v638
        %640 = vmatmul.f32.gmra.mxu0 %v601
        %v641 = vpop.f32.mrf.mxu0
        %v642 = vadd.f32 %v574, %v641
        %643 = vmatmul.f32.gmra.mxu0 %v604
        %v644 = vpop.f32.mrf.mxu0
        %v645 = vadd.f32 %v579, %v644
        %646 = vdwg.mxu0
        %v647 = vtanh.pop %v624
        %v648 = vtanh.pop %v627
        %v649 = vtanh.pop %v630
        %v650 = vtanh.pop %v633
        %v651 = vtanh.pop %v636
        %v652 = vtanh.pop %v639
        %v653 = vtanh.pop %v642
        %v654 = vtanh.pop %v645
        %v655 = vld [vmem:[%s3] sm:$0xff]
        %v656 = vld [vmem:[%s3 + $0x8] sm:$0xff]
        %v657 = vld [vmem:[%s3 + $0x10] sm:$0xff]
        %v658 = vld [vmem:[%s3 + $0x18] sm:$0xff]
        %v659 = vld [vmem:[%s8] sm:$0xff]
        %v660 = vld [vmem:[%s8 + $0x8] sm:$0xff]
        %v661 = vld [vmem:[%s8 + $0x10] sm:$0xff]
        %v662 = vld [vmem:[%s8 + $0x18] sm:$0xff]
        %664 = vset.pattern.permute.xlu0 0
        %665 = vperm.xlu0 %664, %v659
        %v666 = vpop.permute.xlu0 %665
        %669 = vset.pattern.permute.xlu0 0
        %670 = vperm.xlu0 %669, %v660
        %v671 = vpop.permute.xlu0 %670
        %674 = vset.pattern.permute.xlu0 0
        %675 = vperm.xlu0 %674, %v661
        %v676 = vpop.permute.xlu0 %675
        %679 = vset.pattern.permute.xlu0 0
        %680 = vperm.xlu0 %679, %v662
        %v681 = vpop.permute.xlu0 %680
        %vm683 = vcmask 523264
        %v685 = vsel %vm683, %v655, 0
        %v688 = vsel %vm683, %v656, 0
        %v691 = vsel %vm683, %v657, 0
        %v694 = vsel %vm683, %v658, 0
        %696 = vmatpush.msra.mxu0 0.0
        %697 = vmatpush.msra.mxu0 0.0
        %698 = vmatpush.msra.mxu0 0.0
        %699 = vmatpush.msra.mxu0 0.0
        %700 = vmatpush.msra.mxu0 0.0
        %701 = vmatpush.msra.mxu0 0.0
        %702 = vmatpush.msra.mxu0 0.0
        %703 = vmatpush.msra.mxu0 0.0
        %704 = vmatpush.msra.mxu0 %v654
        %705 = vmatpush.msra.mxu0 %v653
        %706 = vmatpush.msra.mxu0 %v652
        %707 = vmatpush.msra.mxu0 %v651
        %708 = vmatpush.msra.mxu0 %v650
        %709 = vmatpush.msra.mxu0 %v649
        %710 = vmatpush.msra.mxu0 %v648
        %711 = vmatpush.msra.mxu0 %v647
        %712 = vmatmul.f32.gmra.mxu0 %v685
        %v713 = vpop.f32.mrf.mxu0
        %v714 = vadd.f32 %v666, %v713
        %715 = vmatmul.f32.gmra.mxu0 %v688
        %v716 = vpop.f32.mrf.mxu0
        %v717 = vadd.f32 %v671, %v716
        %718 = vmatmul.f32.gmra.mxu0 %v691
        %v719 = vpop.f32.mrf.mxu0
        %v720 = vadd.f32 %v676, %v719
        %721 = vmatmul.f32.gmra.mxu0 %v694
        %v722 = vpop.f32.mrf.mxu0
        %v723 = vadd.f32 %v681, %v722
        %724 = vdwg.mxu0
        %v725 = vtanh.pop %v714
        %v726 = vtanh.pop %v717
        %v727 = vtanh.pop %v720
        %v728 = vtanh.pop %v723
        %v729 = vld [vmem:[%s4] sm:$0xff]
        %v730 = vld [vmem:[%s4 + $0x8] sm:$0xff]
        %v731 = vld [vmem:[%s9] sm:$0xff]
        %v732 = vld [vmem:[%s9 + $0x8] sm:$0xff]
        %734 = vset.pattern.permute.xlu0 0
        %735 = vperm.xlu0 %734, %v731
        %v736 = vpop.permute.xlu0 %735
        %739 = vset.pattern.permute.xlu0 0
        %740 = vperm.xlu0 %739, %v732
        %v741 = vpop.permute.xlu0 %740
        %v744 = vsel %vm581, %v729, 0
        %v747 = vsel %vm581, %v730, 0
        %749 = vmatpush.msra.mxu0 0.0
        %750 = vmatpush.msra.mxu0 0.0
        %751 = vmatpush.msra.mxu0 0.0
        %752 = vmatpush.msra.mxu0 0.0
        %753 = vmatpush.msra.mxu0 0.0
        %754 = vmatpush.msra.mxu0 0.0
        %755 = vmatpush.msra.mxu0 0.0
        %756 = vmatpush.msra.mxu0 0.0
        %757 = vmatpush.msra.mxu0 0.0
        %758 = vmatpush.msra.mxu0 0.0
        %759 = vmatpush.msra.mxu0 0.0
        %760 = vmatpush.msra.mxu0 0.0
        %761 = vmatpush.msra.mxu0 %v728
        %762 = vmatpush.msra.mxu0 %v727
        %763 = vmatpush.msra.mxu0 %v726
        %764 = vmatpush.msra.mxu0 %v725
        %765 = vmatmul.f32.gmra.mxu0 %v744
        %v766 = vpop.f32.mrf.mxu0
        %v767 = vadd.f32 %v736, %v766
        %768 = vmatmul.f32.gmra.mxu0 %v747
        %v769 = vpop.f32.mrf.mxu0
        %v770 = vadd.f32 %v741, %v769
        %771 = vdwg.mxu0
        %v772 = vtanh.pop %v767
        %v773 = vtanh.pop %v770
        %v774 = vld [vmem:[%s5] sm:$0x3f]
        %v775 = vld [vmem:[%s10] sm:$0x3f]
        %777 = vset.pattern.permute.xlu0 0
        %778 = vperm.xlu0 %777, %v775
        %v779 = vpop.permute.xlu0 %778
        %vm781 = vcmask 130048
        %v783 = vsel %vm781, %v774, 0
        %785 = vmatpush.msra.mxu0 0.0
        %786 = vmatpush.msra.mxu0 0.0
        %787 = vmatpush.msra.mxu0 0.0
        %788 = vmatpush.msra.mxu0 0.0
        %789 = vmatpush.msra.mxu0 0.0
        %790 = vmatpush.msra.mxu0 0.0
        %791 = vmatpush.msra.mxu0 0.0
        %792 = vmatpush.msra.mxu0 0.0
        %793 = vmatpush.msra.mxu0 0.0
        %794 = vmatpush.msra.mxu0 0.0
        %795 = vmatpush.msra.mxu0 0.0
        %796 = vmatpush.msra.mxu0 0.0
        %797 = vmatpush.msra.mxu0 0.0
        %798 = vmatpush.msra.mxu0 0.0
        %799 = vmatpush.msra.mxu0 %v773
        %800 = vmatpush.msra.mxu0 %v772
        %801 = vmatmul.f32.gmra.mxu0 %v783
        %v802 = vpop.f32.mrf.mxu0
        %v803 = vadd.f32 %v779, %v802
        %804 = vdwg.mxu0
        %805 = vst [vmem:[%s380] sm:$0x3f] %v803
        %s806 = sand.u32 %s269, 1
        %s807 = scalar_lea.sflag [#allocation3], %s806
        %s808 = sand.u32 %s269, 1
        %s809 = smul.addr %s808, 8
        %s810 = scalar_lea.vmem [#allocation2], %s809
        // Predicated region
        $region65: #{tpu_custom_call.1} parent=63 // pred_check
          %p811 = pneg %p279
        $region66: #{tpu_custom_call.1} parent=63 // pred_check_branch
          %813 = sbr.rel (%p811) target = $region68
        $region67: #{tpu_custom_call.1} parent=63 // pred_region
          %815 = vsyncadd %s807, 0
          %s816 = smul.addr %s25, 8
          %s817 = scalar_lea.hbm %s11, %s816
          %s819 = sshll.u32 %s810, 4
          %s820 = int_to_ptr.vmem [resolvable:$true] %s819
          %s821 = sshll.u32 %s817, 4
          %s822 = int_to_ptr.hbm [resolvable:$true] %s821
          %824 = dma.vmem_to_hbm [thread:$0]  %s820, 128, %s822, %s807
        $region68: #{tpu_custom_call.1} parent=63 // pred_fallthru
          _
      $region64: #{tpu_custom_call.1} parent=5 // pred_fallthru
        _
      %p825 = scmp.le.s32.totalorder 2, %s20
      // Predicated region
      $region69: #{tpu_custom_call.1} parent=5 // pred_check
        %p826 = pneg %p825
      $region70: #{tpu_custom_call.1} parent=5 // pred_check_branch
        %828 = sbr.rel (%p826) target = $region72
      $region71: #{tpu_custom_call.1} parent=5 // pred_region
        %s829 = ssub.s32 %s20, 2
        // Predicated region
        $region73: #{tpu_custom_call.1} parent=71 // pred_check
          %p830 = pneg %p285
        $region74: #{tpu_custom_call.1} parent=71 // pred_check_branch
          %832 = sbr.rel (%p830) target = $region76
        $region75: #{tpu_custom_call.1} parent=71 // pred_region
          %s833 = sand.u32 %s270, 1
          %s834 = scalar_lea.sflag [#allocation3], %s833
          %s835 = sand.u32 %s270, 1
          %s836 = smul.addr %s835, 8
          %s837 = scalar_lea.vmem [#allocation2], %s836
          %839 = dma.done %s834, 128
        $region76: #{tpu_custom_call.1} parent=71 // pred_fallthru
          _
      $region72: #{tpu_custom_call.1} parent=5 // pred_fallthru
        _
    $region6: #{tpu_custom_call.1} parent=1 // loop_footer
      %s24 = sadd.s32 1, %s20
    $region7: #{tpu_custom_call.1} parent=1 // loop_footer_branch
      %19 = sbr.rel target = $region3
    $region8: #{tpu_custom_call.1} parent=1 // loop_exit
      _
    %840 = vsyncpa [#allocation3], 1
    %s841 = scalar_lea.sflag [#allocation3], 1
    %842 = vsyncpa %s841, 1

</llo_original>
